<compile_context>
chip_gen: v7x
topology: tpu7x:2x2x1
jax: 0.10.0
libtpu: 0.0.40
codegen_flags: <defaults>
</compile_context>

<pallas_src>
import functools

import jax
import jax.numpy as jnp
from jax.experimental import pallas as pl
from jax.experimental.pallas import tpu as pltpu

FEATURE_DIM = 32
NUM_GRADES = 5
BATCH = 8
BN_EPS = 1e-5

H1 = 512          # grade_predictor hidden 1
H2 = 256          # grade_predictor hidden 2
OH = 256          # ordinal_encoder hidden
CAT1 = H1 + OH    # fused first-layer width (768)
OUT_W = 128       # lane-dense fused output width (logits | ordinal | zero pad)

_INV_SQRT2 = 0.7071067811865476  # hoisted GELU constant


def _gelu_exact(h):
    # PyTorch nn.GELU() default (erf-based, exact). erf lands on the EUP slot.
    return 0.5 * h * (1.0 + jax.lax.erf(h * _INV_SQRT2))


# ---------------------------------------------------------------------------
# Kernel: 7 input refs (x + 6 fused params), 1 lane-dense output ref.
# ---------------------------------------------------------------------------
def grade_head_kernel(x_ref, w1_ref, b1_ref, w2_ref, b2_ref, w3_ref, b3_ref,
                      out_ref):
    x = x_ref[...]

    # Fused first layer of both branches: y = x @ [W1_bnfold | OW1] + [b1' | ob1]
    y = jnp.dot(x, w1_ref[...], preferred_element_type=jnp.float32) + b1_ref[...]
    y = _gelu_exact(y)

    h = y[:, :H1]        # grade_predictor path (BN1 already folded into w1/b1)
    o = y[:, H1:CAT1]    # ordinal_encoder path

    # grade_predictor second layer (BN2 folded into w2/b2) + GELU.
    h = jnp.dot(h, w2_ref[...], preferred_element_type=jnp.float32) + b2_ref[...]
    h = _gelu_exact(h)

    # Fused tail: [h | o] @ block_diag(W3, OW2)_padded + [b3 | ob2]_padded.
    ho = jnp.concatenate([h, o], axis=-1)                      # (tile_m, 512)
    out_ref[...] = (
        jnp.dot(ho, w3_ref[...], preferred_element_type=jnp.float32) + b3_ref[...]
    )


# ---------------------------------------------------------------------------
# Parameter folding (pure wrapper-side algebra; eval-mode equivalent).
# ---------------------------------------------------------------------------
def prepare_params(params, num_grades=NUM_GRADES):
    (w1, b1, g1, be1, m1, v1,
     w2, b2, g2, be2, m2, v2,
     w3, b3, ow1, ob1, ow2, ob2) = params

    # Fold BatchNorm into the preceding Linear:  y*s + (b - m)*s + beta
    s1 = g1 * jax.lax.rsqrt(v1 + BN_EPS)          # (1, 512)
    w1f = w1 * s1                                 # (F, 512)
    b1f = (b1 - m1) * s1 + be1                    # (1, 512)

    s2 = g2 * jax.lax.rsqrt(v2 + BN_EPS)          # (1, 256)
    w2f = w2 * s2                                 # (512, 256)
    b2f = (b2 - m2) * s2 + be2                    # (1, 256)

    # Fuse both branches' first matmuls (they share x).
    w1cat = jnp.concatenate([w1f, ow1], axis=1)   # (F, 768)
    b1cat = jnp.concatenate([b1f, ob1], axis=1)   # (1, 768)

    # Block-diagonal tail weight, zero-padded to 128 lanes (lane-dense output).
    w3cat = jnp.zeros((H2 + OH, OUT_W), jnp.float32)
    w3cat = w3cat.at[:H2, :num_grades].set(w3)
    w3cat = w3cat.at[H2:, num_grades:2 * num_grades - 1].set(ow2)
    b3cat = jnp.zeros((1, OUT_W), jnp.float32)
    b3cat = b3cat.at[:, :num_grades].set(b3)
    b3cat = b3cat.at[:, num_grades:2 * num_grades - 1].set(ob2)

    return (w1cat, b1cat, w2f, b2f, w3cat, b3cat)


# ---------------------------------------------------------------------------
# Wrapper: batch grid with resident weights, lane-dense (B, 128) output.
# ---------------------------------------------------------------------------
@functools.partial(jax.jit, static_argnames=("num_grades",))
def grade_consistency_head(x, prepared, num_grades=NUM_GRADES):
    B, fdim = x.shape
    w1cat, b1cat, w2f, b2f, w3cat, b3cat = prepared

    # Pick the batch tile: 256 rows fills the v6e/v7x MXU; small batches run
    # as a single sublane-aligned tile.
    bp = ((B + 7) // 8) * 8
    if bp <= 256:
        tile_m, b_total = bp, bp
    else:
        tile_m = 256
        b_total = ((B + tile_m - 1) // tile_m) * tile_m
    if b_total != B:
        x = jnp.pad(x, ((0, b_total - B), (0, 0)))

    grid = (b_total // tile_m,)

    # Weights / biases: constant index_map -> resident in VMEM across steps.
    def const2(i):
        return (0, 0)

    out = pl.pallas_call(
        grade_head_kernel,
        out_shape=jax.ShapeDtypeStruct((b_total, OUT_W), jnp.float32),
        grid=grid,
        in_specs=[
            pl.BlockSpec((tile_m, fdim), lambda i: (i, 0)),        # x
            pl.BlockSpec((fdim, CAT1), const2),                    # w1cat
            pl.BlockSpec((1, CAT1), const2),                       # b1cat
            pl.BlockSpec((H1, H2), const2),                        # w2 (BN-folded)
            pl.BlockSpec((1, H2), const2),                         # b2
            pl.BlockSpec((H2 + OH, OUT_W), const2),                # w3 block-diag
            pl.BlockSpec((1, OUT_W), const2),                      # b3 padded
        ],
        out_specs=pl.BlockSpec((tile_m, OUT_W), lambda i: (i, 0)),
        compiler_params=pltpu.CompilerParams(
            dimension_semantics=("parallel",)),
    )(x, w1cat, b1cat, w2f, b2f, w3cat, b3cat)

    logits = out[:B, :num_grades]
    ordinal = out[:B, num_grades:2 * num_grades - 1]
    return logits, ordinal


# ---------------------------------------------------------------------------
# Test harness: PyTorch-style params, pure-JAX reference, comparison.
# ---------------------------------------------------------------------------
def init_params(key, feature_dim=FEATURE_DIM, num_grades=NUM_GRADES):
    ks = jax.random.split(key, 14)
    f32 = jnp.float32

    def lin(k, din, dout):
        kw, kb = jax.random.split(k)
        w = jax.random.normal(kw, (din, dout), f32) * (1.0 / jnp.sqrt(din))
        b = jax.random.normal(kb, (1, dout), f32) * 0.01
        return w, b

    w1, b1 = lin(ks[0], feature_dim, H1)
    w2, b2 = lin(ks[1], H1, H2)
    w3, b3 = lin(ks[2], H2, num_grades)
    ow1, ob1 = lin(ks[3], feature_dim, OH)
    ow2, ob2 = lin(ks[4], OH, num_grades - 1)

    # BatchNorm running stats / affine params (non-trivial, independent keys).
    g1 = jnp.ones((1, H1), f32) + 0.1 * jax.random.normal(ks[5], (1, H1), f32)
    be1 = 0.1 * jax.random.normal(ks[6], (1, H1), f32)
    m1 = 0.1 * jax.random.normal(ks[7], (1, H1), f32)
    v1 = 0.5 + jax.random.uniform(ks[8], (1, H1), f32)

    g2 = jnp.ones((1, H2), f32) + 0.1 * jax.random.normal(ks[9], (1, H2), f32)
    be2 = 0.1 * jax.random.normal(ks[10], (1, H2), f32)
    m2 = 0.1 * jax.random.normal(ks[11], (1, H2), f32)
    v2 = 0.5 + jax.random.uniform(ks[12], (1, H2), f32)

    return (
        w1, b1, g1, be1, m1, v1,
        w2, b2, g2, be2, m2, v2,
        w3, b3,
        ow1, ob1, ow2, ob2,
    )


def reference_forward(x, params):
    (w1, b1, g1, be1, m1, v1,
     w2, b2, g2, be2, m2, v2,
     w3, b3, ow1, ob1, ow2, ob2) = params
    h = x @ w1 + b1
    h = g1 * (h - m1) / jnp.sqrt(v1 + BN_EPS) + be1
    h = jax.nn.gelu(h, approximate=False)
    h = h @ w2 + b2
    h = g2 * (h - m2) / jnp.sqrt(v2 + BN_EPS) + be2
    h = jax.nn.gelu(h, approximate=False)
    logits = h @ w3 + b3
    o = jax.nn.gelu(x @ ow1 + ob1, approximate=False)
    ordinal = o @ ow2 + ob2
    return logits, ordinal


if __name__ == "__main__":
    key = jax.random.PRNGKey(0)
    kx, kp = jax.random.split(key)
    x = jax.random.normal(kx, (BATCH, FEATURE_DIM), jnp.float32)
    params = init_params(kp)

    prepared = prepare_params(params)
    logits, ordinal = grade_consistency_head(x, prepared)
    jax.block_until_ready((logits, ordinal))

    ref_logits, ref_ordinal = reference_forward(x, params)
    assert logits.shape == (BATCH, NUM_GRADES)
    assert ordinal.shape == (BATCH, NUM_GRADES - 1)
    assert jnp.allclose(logits, ref_logits, atol=1e-4, rtol=1e-4)
    assert jnp.allclose(ordinal, ref_ordinal, atol=1e-4, rtol=1e-4)

    print("KERNEL_OK")
</pallas_src>

<mosaic_0001>
module attributes {stable_mosaic.version = 11 : i64} {
  func.func @grade_head_kernel(%arg0: i32, %arg1: memref<8x32xf32, #tpu.memory_space<vmem>>, %arg2: memref<32x768xf32, #tpu.memory_space<vmem>>, %arg3: memref<1x768xf32, #tpu.memory_space<vmem>>, %arg4: memref<512x256xf32, #tpu.memory_space<vmem>>, %arg5: memref<1x256xf32, #tpu.memory_space<vmem>>, %arg6: memref<512x128xf32, #tpu.memory_space<vmem>>, %arg7: memref<1x128xf32, #tpu.memory_space<vmem>>, %arg8: memref<8x128xf32, #tpu.memory_space<vmem>>) attributes {dimension_semantics = [#tpu.dimension_semantics<parallel>], iteration_bounds = array<i64: 1>, scalar_prefetch = 0 : i64, scratch_operands = 0 : i64, tpu.core_type = #tpu.core_type<tc>, window_params = [{transform_indices = @transform_0, window_bounds = array<i64: 8, 32>}, {pipeline_mode = #tpu.pipeline_mode<synchronous>, transform_indices = @transform_1, window_bounds = array<i64: 32, 768>}, {pipeline_mode = #tpu.pipeline_mode<synchronous>, transform_indices = @transform_2, window_bounds = array<i64: 1, 768>}, {pipeline_mode = #tpu.pipeline_mode<synchronous>, transform_indices = @transform_3, window_bounds = array<i64: 512, 256>}, {pipeline_mode = #tpu.pipeline_mode<synchronous>, transform_indices = @transform_4, window_bounds = array<i64: 1, 256>}, {pipeline_mode = #tpu.pipeline_mode<synchronous>, transform_indices = @transform_5, window_bounds = array<i64: 512, 128>}, {pipeline_mode = #tpu.pipeline_mode<synchronous>, transform_indices = @transform_6, window_bounds = array<i64: 1, 128>}, {transform_indices = @transform_7, window_bounds = array<i64: 8, 128>}]} {
    %c0 = arith.constant 0 : index
    %c0_0 = arith.constant 0 : index
    %0 = vector.load %arg1[%c0, %c0_0] : memref<8x32xf32, #tpu.memory_space<vmem>>, vector<8x32xf32>
    %c0_1 = arith.constant 0 : index
    %c0_2 = arith.constant 0 : index
    %1 = vector.load %arg2[%c0_1, %c0_2] : memref<32x768xf32, #tpu.memory_space<vmem>>, vector<32x768xf32>
    %cst = arith.constant dense<0.000000e+00> : vector<8x768xf32>
    %2 = tpu.matmul %0, %1, %cst {dimension_numbers = #tpu.dot_dimension_numbers<[1], [0], [0], [1], [0, 0, 1, 1], [], []>} : vector<8x32xf32>, vector<32x768xf32>, vector<8x768xf32> -> vector<8x768xf32>
    %c0_3 = arith.constant 0 : index
    %c0_4 = arith.constant 0 : index
    %3 = vector.load %arg3[%c0_3, %c0_4] : memref<1x768xf32, #tpu.memory_space<vmem>>, vector<1x768xf32>
    %4 = vector.broadcast %3 : vector<1x768xf32> to vector<8x768xf32>
    %5 = arith.addf %2, %4 : vector<8x768xf32>
    %cst_5 = arith.constant 5.000000e-01 : f32
    %6 = vector.broadcast %cst_5 : f32 to vector<8x768xf32>
    %7 = arith.mulf %6, %5 : vector<8x768xf32>
    %cst_6 = arith.constant 0.707106769 : f32
    %8 = vector.broadcast %cst_6 : f32 to vector<8x768xf32>
    %9 = arith.mulf %5, %8 : vector<8x768xf32>
    %10 = math.erf %9 : vector<8x768xf32>
    %cst_7 = arith.constant 1.000000e+00 : f32
    %11 = vector.broadcast %cst_7 : f32 to vector<8x768xf32>
    %12 = arith.addf %11, %10 : vector<8x768xf32>
    %13 = arith.mulf %7, %12 : vector<8x768xf32>
    %14 = vector.extract_strided_slice %13 {offsets = [0, 0], sizes = [8, 512], strides = [1, 1]} : vector<8x768xf32> to vector<8x512xf32>
    %15 = vector.extract_strided_slice %13 {offsets = [0, 512], sizes = [8, 256], strides = [1, 1]} : vector<8x768xf32> to vector<8x256xf32>
    %c0_8 = arith.constant 0 : index
    %c0_9 = arith.constant 0 : index
    %16 = vector.load %arg4[%c0_8, %c0_9] : memref<512x256xf32, #tpu.memory_space<vmem>>, vector<512x256xf32>
    %cst_10 = arith.constant dense<0.000000e+00> : vector<8x256xf32>
    %17 = tpu.matmul %14, %16, %cst_10 {dimension_numbers = #tpu.dot_dimension_numbers<[1], [0], [0], [1], [0, 0, 1, 1], [], []>} : vector<8x512xf32>, vector<512x256xf32>, vector<8x256xf32> -> vector<8x256xf32>
    %c0_11 = arith.constant 0 : index
    %c0_12 = arith.constant 0 : index
    %18 = vector.load %arg5[%c0_11, %c0_12] : memref<1x256xf32, #tpu.memory_space<vmem>>, vector<1x256xf32>
    %19 = vector.broadcast %18 : vector<1x256xf32> to vector<8x256xf32>
    %20 = arith.addf %17, %19 : vector<8x256xf32>
    %cst_13 = arith.constant 5.000000e-01 : f32
    %21 = vector.broadcast %cst_13 : f32 to vector<8x256xf32>
    %22 = arith.mulf %21, %20 : vector<8x256xf32>
    %cst_14 = arith.constant 0.707106769 : f32
    %23 = vector.broadcast %cst_14 : f32 to vector<8x256xf32>
    %24 = arith.mulf %20, %23 : vector<8x256xf32>
    %25 = math.erf %24 : vector<8x256xf32>
    %cst_15 = arith.constant 1.000000e+00 : f32
    %26 = vector.broadcast %cst_15 : f32 to vector<8x256xf32>
    %27 = arith.addf %26, %25 : vector<8x256xf32>
    %28 = arith.mulf %22, %27 : vector<8x256xf32>
    %29 = tpu.concatenate %28, %15 in 1 : vector<8x256xf32>, vector<8x256xf32> -> vector<8x512xf32>
    %c0_16 = arith.constant 0 : index
    %c0_17 = arith.constant 0 : index
    %30 = vector.load %arg6[%c0_16, %c0_17] : memref<512x128xf32, #tpu.memory_space<vmem>>, vector<512x128xf32>
    %cst_18 = arith.constant dense<0.000000e+00> : vector<8x128xf32>
    %31 = tpu.matmul %29, %30, %cst_18 {dimension_numbers = #tpu.dot_dimension_numbers<[1], [0], [0], [1], [0, 0, 1, 1], [], []>} : vector<8x512xf32>, vector<512x128xf32>, vector<8x128xf32> -> vector<8x128xf32>
    %c0_19 = arith.constant 0 : index
    %c0_20 = arith.constant 0 : index
    %32 = vector.load %arg7[%c0_19, %c0_20] : memref<1x128xf32, #tpu.memory_space<vmem>>, vector<1x128xf32>
    %33 = vector.broadcast %32 : vector<1x128xf32> to vector<8x128xf32>
    %34 = arith.addf %31, %33 : vector<8x128xf32>
    %c0_21 = arith.constant 0 : index
    %c0_22 = arith.constant 0 : index
    %35 = vector.load %arg8[%c0_21, %c0_22] : memref<8x128xf32, #tpu.memory_space<vmem>>, vector<8x128xf32>
    tpu.vector_store %arg8[%c0_21, %c0_22], %34 {strides = array<i32>} : memref<8x128xf32, #tpu.memory_space<vmem>>, vector<8x128xf32>,
    return
  }
  func.func @transform_0(%arg0: i32) -> (i32, i32) {
    %c0_i32 = arith.constant 0 : i32
    %c0_i32_0 = arith.constant 0 : i32
    return %arg0, %c0_i32 : i32, i32
  }
  func.func @transform_1(%arg0: i32) -> (i32, i32) {
    %c0_i32 = arith.constant 0 : i32
    %c0_i32_0 = arith.constant 0 : i32
    %c0_i32_1 = arith.constant 0 : i32
    return %c0_i32, %c0_i32_0 : i32, i32
  }
  func.func @transform_2(%arg0: i32) -> (i32, i32) {
    %c0_i32 = arith.constant 0 : i32
    %c0_i32_0 = arith.constant 0 : i32
    %c0_i32_1 = arith.constant 0 : i32
    return %c0_i32, %c0_i32_0 : i32, i32
  }
  func.func @transform_3(%arg0: i32) -> (i32, i32) {
    %c0_i32 = arith.constant 0 : i32
    %c0_i32_0 = arith.constant 0 : i32
    %c0_i32_1 = arith.constant 0 : i32
    return %c0_i32, %c0_i32_0 : i32, i32
  }
  func.func @transform_4(%arg0: i32) -> (i32, i32) {
    %c0_i32 = arith.constant 0 : i32
    %c0_i32_0 = arith.constant 0 : i32
    %c0_i32_1 = arith.constant 0 : i32
    return %c0_i32, %c0_i32_0 : i32, i32
  }
  func.func @transform_5(%arg0: i32) -> (i32, i32) {
    %c0_i32 = arith.constant 0 : i32
    %c0_i32_0 = arith.constant 0 : i32
    %c0_i32_1 = arith.constant 0 : i32
    return %c0_i32, %c0_i32_0 : i32, i32
  }
  func.func @transform_6(%arg0: i32) -> (i32, i32) {
    %c0_i32 = arith.constant 0 : i32
    %c0_i32_0 = arith.constant 0 : i32
    %c0_i32_1 = arith.constant 0 : i32
    return %c0_i32, %c0_i32_0 : i32, i32
  }
  func.func @transform_7(%arg0: i32) -> (i32, i32) {
    %c0_i32 = arith.constant 0 : i32
    %c0_i32_0 = arith.constant 0 : i32
    return %arg0, %c0_i32 : i32, i32
  }
}

</mosaic_0001>

<llo_original>
// kernel: grade_consistency_head.1
$region0: #{grade_consistency_head.1}
  #allocation0 [shape = 'u32[]', space=smem, size = 0x4, offset = 0x4, fixed_abs, tag = 'smem constant byte address 0x4 - core index']
  #allocation1 [shape = 'u32[144,128]{1,0:T(1,128)}', space=vmem, size = 0x12000, scoped, tag = 'internal scratch']
  %s0 = inlined_call_operand.hbm [shape: f32[8,32], index: 0, kind: input, shape index: {}]
  %s1 = inlined_call_operand.hbm [shape: f32[32,768], index: 1, kind: input, shape index: {}]
  %s2 = inlined_call_operand.vmem [shape: f32[1,768], index: 2, kind: input, shape index: {}]
  %s3 = inlined_call_operand.hbm [shape: f32[512,256], index: 3, kind: input, shape index: {}]
  %s4 = inlined_call_operand.vmem [shape: f32[1,256], index: 4, kind: input, shape index: {}]
  %s5 = inlined_call_operand.hbm [shape: f32[512,128], index: 5, kind: input, shape index: {}]
  %s6 = inlined_call_operand.vmem [shape: f32[1,128], index: 6, kind: input, shape index: {}]
  %s7 = inlined_call_operand.vmem [shape: f32[8,128], index: 7, kind: output, shape index: {}]
  %s8 = sld [smem:[#allocation0]]
  $region54: #{grade_consistency_head.1} parent=0
    _
  %s10 = ssub.s32 1, %s8
  %s11 = scalar_select 0, %s10, %s8
  $region1: #{grade_consistency_head.1} parent=0
    #allocation2 [shape = 'u8[4096]{0}', space=vmem, size = 0x1000, scoped, tag = 'input window, operand 0, single buffered']
    #allocation3 [shape = 's32[1]{0}', space=sflag, size = 0x4, scoped, tag = 'scoped memory for grade_consistency_head.1']
    #allocation4 [shape = 'u8[98304]{0}', space=vmem, size = 0x18000, scoped, tag = 'input window, operand 1, single buffered']
    #allocation5 [shape = 's32[1]{0}', space=sflag, size = 0x4, scoped, tag = 'scoped memory for grade_consistency_head.1']
    #allocation6 [shape = 'u8[524288]{0}', space=vmem, size = 0x80000, scoped, tag = 'input window, operand 3, single buffered']
    #allocation7 [shape = 'u8[262144]{0}', space=vmem, size = 0x40000, scoped, tag = 'input window, operand 5, single buffered']
    #allocation8 [shape = 's32[1]{0}', space=sflag, size = 0x4, scoped, tag = 'scoped memory for grade_consistency_head.1']
    %12 = vsyncpa [#allocation3], 0
    %13 = vsyncpa [#allocation5], 0
    %14 = vsyncpa [#allocation8], 0
    // Predicated region
    $region2: #{grade_consistency_head.1} parent=1 // pred_check
      _
    $region3: #{grade_consistency_head.1} parent=1 // pred_check_branch
      %16 = sbr.rel (0) target = $region5
    $region4: #{grade_consistency_head.1} parent=1 // pred_region
      %s18 = ssub.s32 128, 128
      %19 = vsyncadd [#allocation3], %s18
      %s21 = sshll.u32 [#allocation2], 4
      %s22 = int_to_ptr.vmem [resolvable:$true] %s21
      %24 = dma.hbm_to_vmem [thread:$0]  %s0, 128, %s22, [#allocation3]
    $region5: #{grade_consistency_head.1} parent=1 // pred_fallthru
      _
    // Predicated region
    $region6: #{grade_consistency_head.1} parent=1 // pred_check
      _
    $region7: #{grade_consistency_head.1} parent=1 // pred_check_branch
      %26 = sbr.rel (0) target = $region9
    $region8: #{grade_consistency_head.1} parent=1 // pred_region
      %s28 = ssub.s32 3072, 3072
      %29 = vsyncadd [#allocation5], %s28
      %s30 = sshll.u32 [#allocation4], 4
      %s31 = int_to_ptr.vmem [resolvable:$true] %s30
      %36 = dma.hbm_to_vmem [thread:$0]  %s1, 3072, %s31, [#allocation5], 768, 768, 48
    $region9: #{grade_consistency_head.1} parent=1 // pred_fallthru
      _
    // Predicated region
    $region10: #{grade_consistency_head.1} parent=1 // pred_check
      _
    $region11: #{grade_consistency_head.1} parent=1 // pred_check_branch
      %38 = sbr.rel (0) target = $region13
    $region12: #{grade_consistency_head.1} parent=1 // pred_region
      _
    $region13: #{grade_consistency_head.1} parent=1 // pred_fallthru
      _
    // Predicated region
    $region14: #{grade_consistency_head.1} parent=1 // pred_check
      _
    $region15: #{grade_consistency_head.1} parent=1 // pred_check_branch
      %40 = sbr.rel (0) target = $region17
    $region16: #{grade_consistency_head.1} parent=1 // pred_region
      %s42 = ssub.s32 16384, 16384
      %43 = vsyncadd [#allocation5], %s42
      %s44 = sshll.u32 [#allocation6], 4
      %s45 = int_to_ptr.vmem [resolvable:$true] %s44
      %50 = dma.hbm_to_vmem [thread:$0]  %s3, 16384, %s45, [#allocation5], 256, 256, 16
    $region17: #{grade_consistency_head.1} parent=1 // pred_fallthru
      _
    // Predicated region
    $region18: #{grade_consistency_head.1} parent=1 // pred_check
      _
    $region19: #{grade_consistency_head.1} parent=1 // pred_check_branch
      %52 = sbr.rel (0) target = $region21
    $region20: #{grade_consistency_head.1} parent=1 // pred_region
      _
    $region21: #{grade_consistency_head.1} parent=1 // pred_fallthru
      _
    // Predicated region
    $region22: #{grade_consistency_head.1} parent=1 // pred_check
      _
    $region23: #{grade_consistency_head.1} parent=1 // pred_check_branch
      %54 = sbr.rel (0) target = $region25
    $region24: #{grade_consistency_head.1} parent=1 // pred_region
      %s56 = ssub.s32 8192, 8192
      %57 = vsyncadd [#allocation8], %s56
      %s58 = sshll.u32 [#allocation7], 4
      %s59 = int_to_ptr.vmem [resolvable:$true] %s58
      %64 = dma.hbm_to_vmem [thread:$0]  %s5, 8192, %s59, [#allocation8], 128, 128, 8
    $region25: #{grade_consistency_head.1} parent=1 // pred_fallthru
      _
    // Predicated region
    $region26: #{grade_consistency_head.1} parent=1 // pred_check
      _
    $region27: #{grade_consistency_head.1} parent=1 // pred_check_branch
      %66 = sbr.rel (0) target = $region29
    $region28: #{grade_consistency_head.1} parent=1 // pred_region
      _
    $region29: #{grade_consistency_head.1} parent=1 // pred_fallthru
      _
    // Predicated region
    $region30: #{grade_consistency_head.1} parent=1 // pred_check
      _
    $region31: #{grade_consistency_head.1} parent=1 // pred_check_branch
      %68 = sbr.rel (0) target = $region33
    $region32: #{grade_consistency_head.1} parent=1 // pred_region
      %69 = dma.done [#allocation3], 128
    $region33: #{grade_consistency_head.1} parent=1 // pred_fallthru
      _
    // Predicated region
    $region34: #{grade_consistency_head.1} parent=1 // pred_check
      _
    $region35: #{grade_consistency_head.1} parent=1 // pred_check_branch
      %71 = sbr.rel (0) target = $region37
    $region36: #{grade_consistency_head.1} parent=1 // pred_region
      %72 = dma.done [#allocation5], 3072
    $region37: #{grade_consistency_head.1} parent=1 // pred_fallthru
      _
    // Predicated region
    $region38: #{grade_consistency_head.1} parent=1 // pred_check
      _
    $region39: #{grade_consistency_head.1} parent=1 // pred_check_branch
      %74 = sbr.rel (0) target = $region41
    $region40: #{grade_consistency_head.1} parent=1 // pred_region
      %75 = dma.done [#allocation5], 16384
    $region41: #{grade_consistency_head.1} parent=1 // pred_fallthru
      _
    // Predicated region
    $region42: #{grade_consistency_head.1} parent=1 // pred_check
      _
    $region43: #{grade_consistency_head.1} parent=1 // pred_check_branch
      %77 = sbr.rel (0) target = $region45
    $region44: #{grade_consistency_head.1} parent=1 // pred_region
      %78 = dma.done [#allocation8], 8192
    $region45: #{grade_consistency_head.1} parent=1 // pred_fallthru
      _
    %v79 = vld [vmem:[#allocation2] sm:$0xff]
    %v80 = vld [vmem:[#allocation4] sm:$0xff]
    %v81 = vld [vmem:[#allocation4 + $0x8] sm:$0xff]
    %v82 = vld [vmem:[#allocation4 + $0x10] sm:$0xff]
    %v83 = vld [vmem:[#allocation4 + $0x18] sm:$0xff]
    %v84 = vld [vmem:[#allocation4 + $0x20] sm:$0xff]
    %v85 = vld [vmem:[#allocation4 + $0x28] sm:$0xff]
    %v86 = vld [vmem:[#allocation4 + $0x30] sm:$0xff]
    %v87 = vld [vmem:[#allocation4 + $0x38] sm:$0xff]
    %v88 = vld [vmem:[#allocation4 + $0x40] sm:$0xff]
    %v89 = vld [vmem:[#allocation4 + $0x48] sm:$0xff]
    %v90 = vld [vmem:[#allocation4 + $0x50] sm:$0xff]
    %v91 = vld [vmem:[#allocation4 + $0x58] sm:$0xff]
    %v92 = vld [vmem:[#allocation4 + $0x60] sm:$0xff]
    %v93 = vld [vmem:[#allocation4 + $0x68] sm:$0xff]
    %v94 = vld [vmem:[#allocation4 + $0x70] sm:$0xff]
    %v95 = vld [vmem:[#allocation4 + $0x78] sm:$0xff]
    %v96 = vld [vmem:[#allocation4 + $0x80] sm:$0xff]
    %v97 = vld [vmem:[#allocation4 + $0x88] sm:$0xff]
    %v98 = vld [vmem:[#allocation4 + $0x90] sm:$0xff]
    %v99 = vld [vmem:[#allocation4 + $0x98] sm:$0xff]
    %v100 = vld [vmem:[#allocation4 + $0xa0] sm:$0xff]
    %v101 = vld [vmem:[#allocation4 + $0xa8] sm:$0xff]
    %v102 = vld [vmem:[#allocation4 + $0xb0] sm:$0xff]
    %v103 = vld [vmem:[#allocation4 + $0xb8] sm:$0xff]
    %v104 = vld [vmem:[%s2] sm:$0x3f]
    %v106 = vlaneseq
    %v107 = vshrl.u32 %v106, 7
    %v108 = vsub.s32 0, %v107
    %v109 = vrot.slane %v104, %v108
    %v110 = vlaneseq
    %v111 = vshrl.u32 %v110, 7
    %v112 = vsub.s32 1, %v111
    %v113 = vrot.slane %v104, %v112
    %v114 = vlaneseq
    %v115 = vshrl.u32 %v114, 7
    %v116 = vsub.s32 2, %v115
    %v117 = vrot.slane %v104, %v116
    %v118 = vlaneseq
    %v119 = vshrl.u32 %v118, 7
    %v120 = vsub.s32 3, %v119
    %v121 = vrot.slane %v104, %v120
    %v122 = vlaneseq
    %v123 = vshrl.u32 %v122, 7
    %v124 = vsub.s32 4, %v123
    %v125 = vrot.slane %v104, %v124
    %v126 = vlaneseq
    %v127 = vshrl.u32 %v126, 7
    %v128 = vsub.s32 5, %v127
    %v129 = vrot.slane %v104, %v128
    %vm136 = vcmask 261120
    %v138 = vsel %vm136, %v79, 0
    %140 = vmatprep.subr.mxu0 %v81
    %141 = vmatpush1.msra.mxu0 %v80
    %142 = vmatprep.subr.mxu0 %v87
    %143 = vmatpush1.msra.mxu0 %v86
    %144 = vmatprep.subr.mxu0 %v93
    %145 = vmatpush1.msra.mxu0 %v92
    %146 = vmatprep.subr.mxu0 %v99
    %147 = vmatpush1.msra.mxu0 %v98
    %148 = vmatprep.subr.mxu0 0.0
    %149 = vmatpush1.msra.mxu0 0.0
    %150 = vmatprep.subr.mxu0 0.0
    %151 = vmatpush1.msra.mxu0 0.0
    %152 = vmatprep.subr.mxu0 0.0
    %153 = vmatpush1.msra.mxu0 0.0
    %154 = vmatprep.subr.mxu0 0.0
    %155 = vmatpush1.msra.mxu0 0.0
    %156 = vmatprep.subr.mxu0 0.0
    %157 = vmatpush1.msra.mxu0 0.0
    %158 = vmatprep.subr.mxu0 0.0
    %159 = vmatpush1.msra.mxu0 0.0
    %160 = vmatprep.subr.mxu0 0.0
    %161 = vmatpush1.msra.mxu0 0.0
    %162 = vmatprep.subr.mxu0 0.0
    %163 = vmatpush1.msra.mxu0 0.0
    %164 = vmatprep.subr.mxu0 0.0
    %165 = vmatpush1.msra.mxu0 0.0
    %166 = vmatprep.subr.mxu0 0.0
    %167 = vmatpush1.msra.mxu0 0.0
    %168 = vmatprep.subr.mxu0 0.0
    %169 = vmatpush1.msra.mxu0 0.0
    %170 = vmatprep.subr.mxu0 0.0
    %171 = vmatpush1.msra.mxu0 0.0
    %172 = vmatprep.subr.mxu0 0.0
    %173 = vmatpush1.msra.mxu0 0.0
    %174 = vmatprep.subr.mxu0 0.0
    %175 = vmatpush1.msra.mxu0 0.0
    %176 = vmatprep.subr.mxu0 0.0
    %177 = vmatpush1.msra.mxu0 0.0
    %178 = vmatprep.subr.mxu0 0.0
    %179 = vmatpush1.msra.mxu0 0.0
    %180 = vmatprep.subr.mxu0 0.0
    %181 = vmatpush1.msra.mxu0 0.0
    %182 = vmatprep.subr.mxu0 0.0
    %183 = vmatpush1.msra.mxu0 0.0
    %184 = vmatprep.subr.mxu0 0.0
    %185 = vmatpush1.msra.mxu0 0.0
    %186 = vmatprep.subr.mxu0 0.0
    %187 = vmatpush1.msra.mxu0 0.0
    %188 = vmatprep.subr.mxu0 0.0
    %189 = vmatpush1.msra.mxu0 0.0
    %190 = vmatprep.subr.mxu0 0.0
    %191 = vmatpush1.msra.mxu0 0.0
    %192 = vmatprep.subr.mxu0 0.0
    %193 = vmatpush1.msra.mxu0 0.0
    %194 = vmatprep.subr.mxu0 0.0
    %195 = vmatpush1.msra.mxu0 0.0
    %196 = vmatprep.subr.mxu0 0.0
    %197 = vmatpush1.msra.mxu0 0.0
    %198 = vmatprep.subr.mxu0 0.0
    %199 = vmatpush1.msra.mxu0 0.0
    %200 = vmatprep.subr.mxu0 0.0
    %201 = vmatpush1.msra.mxu0 0.0
    %202 = vmatprep.subr.mxu0 0.0
    %203 = vmatpush1.msra.mxu0 0.0
    %204 = vmatprep.mubr.f32.mxu0 0.0
    %205 = vmatmul.mubr.f32.gmra.mrb[0].mxu0 %v138
    %v206 = vpop.f32.mrb[0].mxu0
    %v207 = vadd.f32 %v109, %v206
    %v208 = vpop.f32.mrb[0].mxu0
    %v209 = vadd.f32 %v113, %v208
    %210 = vdwg.mxu0
    %211 = vmatprep.subr.mxu0 %v83
    %212 = vmatpush1.msra.mxu0 %v82
    %213 = vmatprep.subr.mxu0 %v89
    %214 = vmatpush1.msra.mxu0 %v88
    %215 = vmatprep.subr.mxu0 %v95
    %216 = vmatpush1.msra.mxu0 %v94
    %217 = vmatprep.subr.mxu0 %v101
    %218 = vmatpush1.msra.mxu0 %v100
    %219 = vmatprep.subr.mxu0 0.0
    %220 = vmatpush1.msra.mxu0 0.0
    %221 = vmatprep.subr.mxu0 0.0
    %222 = vmatpush1.msra.mxu0 0.0
    %223 = vmatprep.subr.mxu0 0.0
    %224 = vmatpush1.msra.mxu0 0.0
    %225 = vmatprep.subr.mxu0 0.0
    %226 = vmatpush1.msra.mxu0 0.0
    %227 = vmatprep.subr.mxu0 0.0
    %228 = vmatpush1.msra.mxu0 0.0
    %229 = vmatprep.subr.mxu0 0.0
    %230 = vmatpush1.msra.mxu0 0.0
    %231 = vmatprep.subr.mxu0 0.0
    %232 = vmatpush1.msra.mxu0 0.0
    %233 = vmatprep.subr.mxu0 0.0
    %234 = vmatpush1.msra.mxu0 0.0
    %235 = vmatprep.subr.mxu0 0.0
    %236 = vmatpush1.msra.mxu0 0.0
    %237 = vmatprep.subr.mxu0 0.0
    %238 = vmatpush1.msra.mxu0 0.0
    %239 = vmatprep.subr.mxu0 0.0
    %240 = vmatpush1.msra.mxu0 0.0
    %241 = vmatprep.subr.mxu0 0.0
    %242 = vmatpush1.msra.mxu0 0.0
    %243 = vmatprep.subr.mxu0 0.0
    %244 = vmatpush1.msra.mxu0 0.0
    %245 = vmatprep.subr.mxu0 0.0
    %246 = vmatpush1.msra.mxu0 0.0
    %247 = vmatprep.subr.mxu0 0.0
    %248 = vmatpush1.msra.mxu0 0.0
    %249 = vmatprep.subr.mxu0 0.0
    %250 = vmatpush1.msra.mxu0 0.0
    %251 = vmatprep.subr.mxu0 0.0
    %252 = vmatpush1.msra.mxu0 0.0
    %253 = vmatprep.subr.mxu0 0.0
    %254 = vmatpush1.msra.mxu0 0.0
    %255 = vmatprep.subr.mxu0 0.0
    %256 = vmatpush1.msra.mxu0 0.0
    %257 = vmatprep.subr.mxu0 0.0
    %258 = vmatpush1.msra.mxu0 0.0
    %259 = vmatprep.subr.mxu0 0.0
    %260 = vmatpush1.msra.mxu0 0.0
    %261 = vmatprep.subr.mxu0 0.0
    %262 = vmatpush1.msra.mxu0 0.0
    %263 = vmatprep.subr.mxu0 0.0
    %264 = vmatpush1.msra.mxu0 0.0
    %265 = vmatprep.subr.mxu0 0.0
    %266 = vmatpush1.msra.mxu0 0.0
    %267 = vmatprep.subr.mxu0 0.0
    %268 = vmatpush1.msra.mxu0 0.0
    %269 = vmatprep.subr.mxu0 0.0
    %270 = vmatpush1.msra.mxu0 0.0
    %271 = vmatprep.subr.mxu0 0.0
    %272 = vmatpush1.msra.mxu0 0.0
    %273 = vmatprep.subr.mxu0 0.0
    %274 = vmatpush1.msra.mxu0 0.0
    %275 = vmatprep.mubr.f32.mxu0 0.0
    %276 = vmatmul.mubr.f32.gmra.mrb[0].mxu0 %v138
    %v277 = vpop.f32.mrb[0].mxu0
    %v278 = vadd.f32 %v117, %v277
    %v279 = vpop.f32.mrb[0].mxu0
    %v280 = vadd.f32 %v121, %v279
    %281 = vdwg.mxu0
    %282 = vmatprep.subr.mxu0 %v85
    %283 = vmatpush1.msra.mxu0 %v84
    %284 = vmatprep.subr.mxu0 %v91
    %285 = vmatpush1.msra.mxu0 %v90
    %286 = vmatprep.subr.mxu0 %v97
    %287 = vmatpush1.msra.mxu0 %v96
    %288 = vmatprep.subr.mxu0 %v103
    %289 = vmatpush1.msra.mxu0 %v102
    %290 = vmatprep.subr.mxu0 0.0
    %291 = vmatpush1.msra.mxu0 0.0
    %292 = vmatprep.subr.mxu0 0.0
    %293 = vmatpush1.msra.mxu0 0.0
    %294 = vmatprep.subr.mxu0 0.0
    %295 = vmatpush1.msra.mxu0 0.0
    %296 = vmatprep.subr.mxu0 0.0
    %297 = vmatpush1.msra.mxu0 0.0
    %298 = vmatprep.subr.mxu0 0.0
    %299 = vmatpush1.msra.mxu0 0.0
    %300 = vmatprep.subr.mxu0 0.0
    %301 = vmatpush1.msra.mxu0 0.0
    %302 = vmatprep.subr.mxu0 0.0
    %303 = vmatpush1.msra.mxu0 0.0
    %304 = vmatprep.subr.mxu0 0.0
    %305 = vmatpush1.msra.mxu0 0.0
    %306 = vmatprep.subr.mxu0 0.0
    %307 = vmatpush1.msra.mxu0 0.0
    %308 = vmatprep.subr.mxu0 0.0
    %309 = vmatpush1.msra.mxu0 0.0
    %310 = vmatprep.subr.mxu0 0.0
    %311 = vmatpush1.msra.mxu0 0.0
    %312 = vmatprep.subr.mxu0 0.0
    %313 = vmatpush1.msra.mxu0 0.0
    %314 = vmatprep.subr.mxu0 0.0
    %315 = vmatpush1.msra.mxu0 0.0
    %316 = vmatprep.subr.mxu0 0.0
    %317 = vmatpush1.msra.mxu0 0.0
    %318 = vmatprep.subr.mxu0 0.0
    %319 = vmatpush1.msra.mxu0 0.0
    %320 = vmatprep.subr.mxu0 0.0
    %321 = vmatpush1.msra.mxu0 0.0
    %322 = vmatprep.subr.mxu0 0.0
    %323 = vmatpush1.msra.mxu0 0.0
    %324 = vmatprep.subr.mxu0 0.0
    %325 = vmatpush1.msra.mxu0 0.0
    %326 = vmatprep.subr.mxu0 0.0
    %327 = vmatpush1.msra.mxu0 0.0
    %328 = vmatprep.subr.mxu0 0.0
    %329 = vmatpush1.msra.mxu0 0.0
    %330 = vmatprep.subr.mxu0 0.0
    %331 = vmatpush1.msra.mxu0 0.0
    %332 = vmatprep.subr.mxu0 0.0
    %333 = vmatpush1.msra.mxu0 0.0
    %334 = vmatprep.subr.mxu0 0.0
    %335 = vmatpush1.msra.mxu0 0.0
    %336 = vmatprep.subr.mxu0 0.0
    %337 = vmatpush1.msra.mxu0 0.0
    %338 = vmatprep.subr.mxu0 0.0
    %339 = vmatpush1.msra.mxu0 0.0
    %340 = vmatprep.subr.mxu0 0.0
    %341 = vmatpush1.msra.mxu0 0.0
    %342 = vmatprep.subr.mxu0 0.0
    %343 = vmatpush1.msra.mxu0 0.0
    %344 = vmatprep.subr.mxu0 0.0
    %345 = vmatpush1.msra.mxu0 0.0
    %346 = vmatprep.mubr.f32.mxu0 0.0
    %347 = vmatmul.mubr.f32.gmra.mrb[0].mxu0 %v138
    %v348 = vpop.f32.mrb[0].mxu0
    %v349 = vadd.f32 %v125, %v348
    %v350 = vpop.f32.mrb[0].mxu0
    %v351 = vadd.f32 %v129, %v350
    %352 = vdwg.mxu0
    %v353 = vmul.f32 %v207, 0.5
    %v354 = vmul.f32 %v209, 0.5
    %v355 = vmul.f32 %v278, 0.5
    %v356 = vmul.f32 %v280, 0.5
    %v357 = vmul.f32 %v349, 0.5
    %v358 = vmul.f32 %v351, 0.5
    %v359 = vmul.f32 %v207, 0.70710677
    %v360 = vmul.f32 %v209, 0.70710677
    %v361 = vmul.f32 %v278, 0.70710677
    %v362 = vmul.f32 %v280, 0.70710677
    %v363 = vmul.f32 %v349, 0.70710677
    %v364 = vmul.f32 %v351, 0.70710677
    %v365 = verf.f32.pop %v359
    %v366 = verf.f32.pop %v360
    %v367 = verf.f32.pop %v361
    %v368 = verf.f32.pop %v362
    %v369 = verf.f32.pop %v363
    %v370 = verf.f32.pop %v364
    %v371 = vadd.f32 %v365, 1.0
    %v372 = vadd.f32 %v366, 1.0
    %v373 = vadd.f32 %v367, 1.0
    %v374 = vadd.f32 %v368, 1.0
    %v375 = vadd.f32 %v369, 1.0
    %v376 = vadd.f32 %v370, 1.0
    %v377 = vmul.f32 %v353, %v371
    %v378 = vmul.f32 %v354, %v372
    %v379 = vmul.f32 %v355, %v373
    %v380 = vmul.f32 %v356, %v374
    %v381 = vmul.f32 %v357, %v375
    %v382 = vmul.f32 %v358, %v376
    %v383 = vld [vmem:[#allocation6] sm:$0xff]
    %v384 = vld [vmem:[#allocation6 + $0x8] sm:$0xff]
    %v385 = vld [vmem:[#allocation6 + $0x10] sm:$0xff]
    %v386 = vld [vmem:[#allocation6 + $0x18] sm:$0xff]
    %v387 = vld [vmem:[#allocation6 + $0x20] sm:$0xff]
    %v388 = vld [vmem:[#allocation6 + $0x28] sm:$0xff]
    %v389 = vld [vmem:[#allocation6 + $0x30] sm:$0xff]
    %v390 = vld [vmem:[#allocation6 + $0x38] sm:$0xff]
    %v391 = vld [vmem:[#allocation6 + $0x40] sm:$0xff]
    %v392 = vld [vmem:[#allocation6 + $0x48] sm:$0xff]
    %v393 = vld [vmem:[#allocation6 + $0x50] sm:$0xff]
    %v394 = vld [vmem:[#allocation6 + $0x58] sm:$0xff]
    %v395 = vld [vmem:[#allocation6 + $0x60] sm:$0xff]
    %v396 = vld [vmem:[#allocation6 + $0x68] sm:$0xff]
    %v397 = vld [vmem:[#allocation6 + $0x70] sm:$0xff]
    %v398 = vld [vmem:[#allocation6 + $0x78] sm:$0xff]
    %v399 = vld [vmem:[#allocation6 + $0x80] sm:$0xff]
    %v400 = vld [vmem:[#allocation6 + $0x88] sm:$0xff]
    %v401 = vld [vmem:[#allocation6 + $0x90] sm:$0xff]
    %v402 = vld [vmem:[#allocation6 + $0x98] sm:$0xff]
    %v403 = vld [vmem:[#allocation6 + $0xa0] sm:$0xff]
    %v404 = vld [vmem:[#allocation6 + $0xa8] sm:$0xff]
    %v405 = vld [vmem:[#allocation6 + $0xb0] sm:$0xff]
    %v406 = vld [vmem:[#allocation6 + $0xb8] sm:$0xff]
    %v407 = vld [vmem:[#allocation6 + $0xc0] sm:$0xff]
    %v408 = vld [vmem:[#allocation6 + $0xc8] sm:$0xff]
    %v409 = vld [vmem:[#allocation6 + $0xd0] sm:$0xff]
    %v410 = vld [vmem:[#allocation6 + $0xd8] sm:$0xff]
    %v411 = vld [vmem:[#allocation6 + $0xe0] sm:$0xff]
    %v412 = vld [vmem:[#allocation6 + $0xe8] sm:$0xff]
    %v413 = vld [vmem:[#allocation6 + $0xf0] sm:$0xff]
    %v414 = vld [vmem:[#allocation6 + $0xf8] sm:$0xff]
    %v415 = vld [vmem:[#allocation6 + $0x100] sm:$0xff]
    %v416 = vld [vmem:[#allocation6 + $0x108] sm:$0xff]
    %v417 = vld [vmem:[#allocation6 + $0x110] sm:$0xff]
    %v418 = vld [vmem:[#allocation6 + $0x118] sm:$0xff]
    %v419 = vld [vmem:[#allocation6 + $0x120] sm:$0xff]
    %v420 = vld [vmem:[#allocation6 + $0x128] sm:$0xff]
    %v421 = vld [vmem:[#allocation6 + $0x130] sm:$0xff]
    %v422 = vld [vmem:[#allocation6 + $0x138] sm:$0xff]
    %v423 = vld [vmem:[#allocation6 + $0x140] sm:$0xff]
    %v424 = vld [vmem:[#allocation6 + $0x148] sm:$0xff]
    %v425 = vld [vmem:[#allocation6 + $0x150] sm:$0xff]
    %v426 = vld [vmem:[#allocation6 + $0x158] sm:$0xff]
    %v427 = vld [vmem:[#allocation6 + $0x160] sm:$0xff]
    %v428 = vld [vmem:[#allocation6 + $0x168] sm:$0xff]
    %v429 = vld [vmem:[#allocation6 + $0x170] sm:$0xff]
    %v430 = vld [vmem:[#allocation6 + $0x178] sm:$0xff]
    %v431 = vld [vmem:[#allocation6 + $0x180] sm:$0xff]
    %v432 = vld [vmem:[#allocation6 + $0x188] sm:$0xff]
    %v433 = vld [vmem:[#allocation6 + $0x190] sm:$0xff]
    %v434 = vld [vmem:[#allocation6 + $0x198] sm:$0xff]
    %v435 = vld [vmem:[#allocation6 + $0x1a0] sm:$0xff]
    %v436 = vld [vmem:[#allocation6 + $0x1a8] sm:$0xff]
    %v437 = vld [vmem:[#allocation6 + $0x1b0] sm:$0xff]
    %v438 = vld [vmem:[#allocation6 + $0x1b8] sm:$0xff]
    %v439 = vld [vmem:[#allocation6 + $0x1c0] sm:$0xff]
    %v440 = vld [vmem:[#allocation6 + $0x1c8] sm:$0xff]
    %v441 = vld [vmem:[#allocation6 + $0x1d0] sm:$0xff]
    %v442 = vld [vmem:[#allocation6 + $0x1d8] sm:$0xff]
    %v443 = vld [vmem:[#allocation6 + $0x1e0] sm:$0xff]
    %v444 = vld [vmem:[#allocation6 + $0x1e8] sm:$0xff]
    %v445 = vld [vmem:[#allocation6 + $0x1f0] sm:$0xff]
    %v446 = vld [vmem:[#allocation6 + $0x1f8] sm:$0xff]
    %v447 = vld [vmem:[#allocation6 + $0x200] sm:$0xff]
    %v448 = vld [vmem:[#allocation6 + $0x208] sm:$0xff]
    %v449 = vld [vmem:[#allocation6 + $0x210] sm:$0xff]
    %v450 = vld [vmem:[#allocation6 + $0x218] sm:$0xff]
    %v451 = vld [vmem:[#allocation6 + $0x220] sm:$0xff]
    %v452 = vld [vmem:[#allocation6 + $0x228] sm:$0xff]
    %v453 = vld [vmem:[#allocation6 + $0x230] sm:$0xff]
    %v454 = vld [vmem:[#allocation6 + $0x238] sm:$0xff]
    %v455 = vld [vmem:[#allocation6 + $0x240] sm:$0xff]
    %v456 = vld [vmem:[#allocation6 + $0x248] sm:$0xff]
    %v457 = vld [vmem:[#allocation6 + $0x250] sm:$0xff]
    %v458 = vld [vmem:[#allocation6 + $0x258] sm:$0xff]
    %v459 = vld [vmem:[#allocation6 + $0x260] sm:$0xff]
    %v460 = vld [vmem:[#allocation6 + $0x268] sm:$0xff]
    %v461 = vld [vmem:[#allocation6 + $0x270] sm:$0xff]
    %v462 = vld [vmem:[#allocation6 + $0x278] sm:$0xff]
    %v463 = vld [vmem:[#allocation6 + $0x280] sm:$0xff]
    %v464 = vld [vmem:[#allocation6 + $0x288] sm:$0xff]
    %v465 = vld [vmem:[#allocation6 + $0x290] sm:$0xff]
    %v466 = vld [vmem:[#allocation6 + $0x298] sm:$0xff]
    %v467 = vld [vmem:[#allocation6 + $0x2a0] sm:$0xff]
    %v468 = vld [vmem:[#allocation6 + $0x2a8] sm:$0xff]
    %v469 = vld [vmem:[#allocation6 + $0x2b0] sm:$0xff]
    %v470 = vld [vmem:[#allocation6 + $0x2b8] sm:$0xff]
    %v471 = vld [vmem:[#allocation6 + $0x2c0] sm:$0xff]
    %v472 = vld [vmem:[#allocation6 + $0x2c8] sm:$0xff]
    %v473 = vld [vmem:[#allocation6 + $0x2d0] sm:$0xff]
    %v474 = vld [vmem:[#allocation6 + $0x2d8] sm:$0xff]
    %v475 = vld [vmem:[#allocation6 + $0x2e0] sm:$0xff]
    %v476 = vld [vmem:[#allocation6 + $0x2e8] sm:$0xff]
    %v477 = vld [vmem:[#allocation6 + $0x2f0] sm:$0xff]
    %v478 = vld [vmem:[#allocation6 + $0x2f8] sm:$0xff]
    %v479 = vld [vmem:[#allocation6 + $0x300] sm:$0xff]
    %v480 = vld [vmem:[#allocation6 + $0x308] sm:$0xff]
    %v481 = vld [vmem:[#allocation6 + $0x310] sm:$0xff]
    %v482 = vld [vmem:[#allocation6 + $0x318] sm:$0xff]
    %v483 = vld [vmem:[#allocation6 + $0x320] sm:$0xff]
    %v484 = vld [vmem:[#allocation6 + $0x328] sm:$0xff]
    %v485 = vld [vmem:[#allocation6 + $0x330] sm:$0xff]
    %v486 = vld [vmem:[#allocation6 + $0x338] sm:$0xff]
    %v487 = vld [vmem:[#allocation6 + $0x340] sm:$0xff]
    %v488 = vld [vmem:[#allocation6 + $0x348] sm:$0xff]
    %v489 = vld [vmem:[#allocation6 + $0x350] sm:$0xff]
    %v490 = vld [vmem:[#allocation6 + $0x358] sm:$0xff]
    %v491 = vld [vmem:[#allocation6 + $0x360] sm:$0xff]
    %v492 = vld [vmem:[#allocation6 + $0x368] sm:$0xff]
    %v493 = vld [vmem:[#allocation6 + $0x370] sm:$0xff]
    %v494 = vld [vmem:[#allocation6 + $0x378] sm:$0xff]
    %v495 = vld [vmem:[#allocation6 + $0x380] sm:$0xff]
    %v496 = vld [vmem:[#allocation6 + $0x388] sm:$0xff]
    %v497 = vld [vmem:[#allocation6 + $0x390] sm:$0xff]
    %v498 = vld [vmem:[#allocation6 + $0x398] sm:$0xff]
    %v499 = vld [vmem:[#allocation6 + $0x3a0] sm:$0xff]
    %v500 = vld [vmem:[#allocation6 + $0x3a8] sm:$0xff]
    %v501 = vld [vmem:[#allocation6 + $0x3b0] sm:$0xff]
    %v502 = vld [vmem:[#allocation6 + $0x3b8] sm:$0xff]
    %v503 = vld [vmem:[#allocation6 + $0x3c0] sm:$0xff]
    %v504 = vld [vmem:[#allocation6 + $0x3c8] sm:$0xff]
    %v505 = vld [vmem:[#allocation6 + $0x3d0] sm:$0xff]
    %v506 = vld [vmem:[#allocation6 + $0x3d8] sm:$0xff]
    %v507 = vld [vmem:[#allocation6 + $0x3e0] sm:$0xff]
    %v508 = vld [vmem:[#allocation6 + $0x3e8] sm:$0xff]
    %v509 = vld [vmem:[#allocation6 + $0x3f0] sm:$0xff]
    %v510 = vld [vmem:[#allocation6 + $0x3f8] sm:$0xff]
    %v511 = vld [vmem:[%s4] sm:$0x3]
    %v513 = vlaneseq
    %v514 = vshrl.u32 %v513, 7
    %v515 = vsub.s32 0, %v514
    %v516 = vrot.slane %v511, %v515
    %v517 = vlaneseq
    %v518 = vshrl.u32 %v517, 7
    %v519 = vsub.s32 1, %v518
    %v520 = vrot.slane %v511, %v519
    %523 = vmatprep.subr.mxu0 %v384
    %524 = vmatpush1.msra.mxu0 %v383
    %525 = vmatprep.subr.mxu0 %v386
    %526 = vmatpush1.msra.mxu0 %v385
    %527 = vmatprep.subr.mxu0 %v388
    %528 = vmatpush1.msra.mxu0 %v387
    %529 = vmatprep.subr.mxu0 %v390
    %530 = vmatpush1.msra.mxu0 %v389
    %531 = vmatprep.subr.mxu0 %v392
    %532 = vmatpush1.msra.mxu0 %v391
    %533 = vmatprep.subr.mxu0 %v394
    %534 = vmatpush1.msra.mxu0 %v393
    %535 = vmatprep.subr.mxu0 %v396
    %536 = vmatpush1.msra.mxu0 %v395
    %537 = vmatprep.subr.mxu0 %v398
    %538 = vmatpush1.msra.mxu0 %v397
    %539 = vmatprep.subr.mxu0 %v400
    %540 = vmatpush1.msra.mxu0 %v399
    %541 = vmatprep.subr.mxu0 %v402
    %542 = vmatpush1.msra.mxu0 %v401
    %543 = vmatprep.subr.mxu0 %v404
    %544 = vmatpush1.msra.mxu0 %v403
    %545 = vmatprep.subr.mxu0 %v406
    %546 = vmatpush1.msra.mxu0 %v405
    %547 = vmatprep.subr.mxu0 %v408
    %548 = vmatpush1.msra.mxu0 %v407
    %549 = vmatprep.subr.mxu0 %v410
    %550 = vmatpush1.msra.mxu0 %v409
    %551 = vmatprep.subr.mxu0 %v412
    %552 = vmatpush1.msra.mxu0 %v411
    %553 = vmatprep.subr.mxu0 %v414
    %554 = vmatpush1.msra.mxu0 %v413
    %555 = vmatprep.subr.mxu0 %v416
    %556 = vmatpush1.msra.mxu0 %v415
    %557 = vmatprep.subr.mxu0 %v418
    %558 = vmatpush1.msra.mxu0 %v417
    %559 = vmatprep.subr.mxu0 %v420
    %560 = vmatpush1.msra.mxu0 %v419
    %561 = vmatprep.subr.mxu0 %v422
    %562 = vmatpush1.msra.mxu0 %v421
    %563 = vmatprep.subr.mxu0 %v424
    %564 = vmatpush1.msra.mxu0 %v423
    %565 = vmatprep.subr.mxu0 %v426
    %566 = vmatpush1.msra.mxu0 %v425
    %567 = vmatprep.subr.mxu0 %v428
    %568 = vmatpush1.msra.mxu0 %v427
    %569 = vmatprep.subr.mxu0 %v430
    %570 = vmatpush1.msra.mxu0 %v429
    %571 = vmatprep.subr.mxu0 %v432
    %572 = vmatpush1.msra.mxu0 %v431
    %573 = vmatprep.subr.mxu0 %v434
    %574 = vmatpush1.msra.mxu0 %v433
    %575 = vmatprep.subr.mxu0 %v436
    %576 = vmatpush1.msra.mxu0 %v435
    %577 = vmatprep.subr.mxu0 %v438
    %578 = vmatpush1.msra.mxu0 %v437
    %579 = vmatprep.subr.mxu0 %v440
    %580 = vmatpush1.msra.mxu0 %v439
    %581 = vmatprep.subr.mxu0 %v442
    %582 = vmatpush1.msra.mxu0 %v441
    %583 = vmatprep.subr.mxu0 %v444
    %584 = vmatpush1.msra.mxu0 %v443
    %585 = vmatprep.subr.mxu0 %v446
    %586 = vmatpush1.msra.mxu0 %v445
    %587 = vmatprep.mubr.f32.mxu0 %v378
    %588 = vmatmul.mubr.f32.gmra.mrb[0].mxu0 %v377
    %v589 = vpop.f32.mrb[0].mxu0
    %v590 = vadd.f32 %v516, %v589
    %v591 = vpop.f32.mrb[0].mxu0
    %v592 = vadd.f32 %v520, %v591
    %593 = vdwg.mxu0
    %594 = vmatprep.subr.mxu0 %v448
    %595 = vmatpush1.msra.mxu0 %v447
    %596 = vmatprep.subr.mxu0 %v450
    %597 = vmatpush1.msra.mxu0 %v449
    %598 = vmatprep.subr.mxu0 %v452
    %599 = vmatpush1.msra.mxu0 %v451
    %600 = vmatprep.subr.mxu0 %v454
    %601 = vmatpush1.msra.mxu0 %v453
    %602 = vmatprep.subr.mxu0 %v456
    %603 = vmatpush1.msra.mxu0 %v455
    %604 = vmatprep.subr.mxu0 %v458
    %605 = vmatpush1.msra.mxu0 %v457
    %606 = vmatprep.subr.mxu0 %v460
    %607 = vmatpush1.msra.mxu0 %v459
    %608 = vmatprep.subr.mxu0 %v462
    %609 = vmatpush1.msra.mxu0 %v461
    %610 = vmatprep.subr.mxu0 %v464
    %611 = vmatpush1.msra.mxu0 %v463
    %612 = vmatprep.subr.mxu0 %v466
    %613 = vmatpush1.msra.mxu0 %v465
    %614 = vmatprep.subr.mxu0 %v468
    %615 = vmatpush1.msra.mxu0 %v467
    %616 = vmatprep.subr.mxu0 %v470
    %617 = vmatpush1.msra.mxu0 %v469
    %618 = vmatprep.subr.mxu0 %v472
    %619 = vmatpush1.msra.mxu0 %v471
    %620 = vmatprep.subr.mxu0 %v474
    %621 = vmatpush1.msra.mxu0 %v473
    %622 = vmatprep.subr.mxu0 %v476
    %623 = vmatpush1.msra.mxu0 %v475
    %624 = vmatprep.subr.mxu0 %v478
    %625 = vmatpush1.msra.mxu0 %v477
    %626 = vmatprep.subr.mxu0 %v480
    %627 = vmatpush1.msra.mxu0 %v479
    %628 = vmatprep.subr.mxu0 %v482
    %629 = vmatpush1.msra.mxu0 %v481
    %630 = vmatprep.subr.mxu0 %v484
    %631 = vmatpush1.msra.mxu0 %v483
    %632 = vmatprep.subr.mxu0 %v486
    %633 = vmatpush1.msra.mxu0 %v485
    %634 = vmatprep.subr.mxu0 %v488
    %635 = vmatpush1.msra.mxu0 %v487
    %636 = vmatprep.subr.mxu0 %v490
    %637 = vmatpush1.msra.mxu0 %v489
    %638 = vmatprep.subr.mxu0 %v492
    %639 = vmatpush1.msra.mxu0 %v491
    %640 = vmatprep.subr.mxu0 %v494
    %641 = vmatpush1.msra.mxu0 %v493
    %642 = vmatprep.subr.mxu0 %v496
    %643 = vmatpush1.msra.mxu0 %v495
    %644 = vmatprep.subr.mxu0 %v498
    %645 = vmatpush1.msra.mxu0 %v497
    %646 = vmatprep.subr.mxu0 %v500
    %647 = vmatpush1.msra.mxu0 %v499
    %648 = vmatprep.subr.mxu0 %v502
    %649 = vmatpush1.msra.mxu0 %v501
    %650 = vmatprep.subr.mxu0 %v504
    %651 = vmatpush1.msra.mxu0 %v503
    %652 = vmatprep.subr.mxu0 %v506
    %653 = vmatpush1.msra.mxu0 %v505
    %654 = vmatprep.subr.mxu0 %v508
    %655 = vmatpush1.msra.mxu0 %v507
    %656 = vmatprep.subr.mxu0 %v510
    %657 = vmatpush1.msra.mxu0 %v509
    %658 = vmatprep.mubr.f32.mxu0 %v380
    %659 = vmatmul.mubr.f32.gmra.mrb[0].mxu0 %v379
    %v660 = vpop.f32.mrb[0].mxu0
    %v661 = vadd.f32 %v590, %v660
    %v662 = vpop.f32.mrb[0].mxu0
    %v663 = vadd.f32 %v592, %v662
    %664 = vdwg.mxu0
    %v665 = vmul.f32 %v661, 0.5
    %v666 = vmul.f32 %v663, 0.5
    %v667 = vmul.f32 %v661, 0.70710677
    %v668 = vmul.f32 %v663, 0.70710677
    %v669 = verf.f32.pop %v667
    %v670 = verf.f32.pop %v668
    %v671 = vadd.f32 %v669, 1.0
    %v672 = vadd.f32 %v670, 1.0
    %v673 = vmul.f32 %v665, %v671
    %v674 = vmul.f32 %v666, %v672
    %v675 = vld [vmem:[#allocation7] sm:$0xff]
    %v676 = vld [vmem:[#allocation7 + $0x8] sm:$0xff]
    %v677 = vld [vmem:[#allocation7 + $0x10] sm:$0xff]
    %v678 = vld [vmem:[#allocation7 + $0x18] sm:$0xff]
    %v679 = vld [vmem:[#allocation7 + $0x20] sm:$0xff]
    %v680 = vld [vmem:[#allocation7 + $0x28] sm:$0xff]
    %v681 = vld [vmem:[#allocation7 + $0x30] sm:$0xff]
    %v682 = vld [vmem:[#allocation7 + $0x38] sm:$0xff]
    %v683 = vld [vmem:[#allocation7 + $0x40] sm:$0xff]
    %v684 = vld [vmem:[#allocation7 + $0x48] sm:$0xff]
    %v685 = vld [vmem:[#allocation7 + $0x50] sm:$0xff]
    %v686 = vld [vmem:[#allocation7 + $0x58] sm:$0xff]
    %v687 = vld [vmem:[#allocation7 + $0x60] sm:$0xff]
    %v688 = vld [vmem:[#allocation7 + $0x68] sm:$0xff]
    %v689 = vld [vmem:[#allocation7 + $0x70] sm:$0xff]
    %v690 = vld [vmem:[#allocation7 + $0x78] sm:$0xff]
    %v691 = vld [vmem:[#allocation7 + $0x80] sm:$0xff]
    %v692 = vld [vmem:[#allocation7 + $0x88] sm:$0xff]
    %v693 = vld [vmem:[#allocation7 + $0x90] sm:$0xff]
    %v694 = vld [vmem:[#allocation7 + $0x98] sm:$0xff]
    %v695 = vld [vmem:[#allocation7 + $0xa0] sm:$0xff]
    %v696 = vld [vmem:[#allocation7 + $0xa8] sm:$0xff]
    %v697 = vld [vmem:[#allocation7 + $0xb0] sm:$0xff]
    %v698 = vld [vmem:[#allocation7 + $0xb8] sm:$0xff]
    %v699 = vld [vmem:[#allocation7 + $0xc0] sm:$0xff]
    %v700 = vld [vmem:[#allocation7 + $0xc8] sm:$0xff]
    %v701 = vld [vmem:[#allocation7 + $0xd0] sm:$0xff]
    %v702 = vld [vmem:[#allocation7 + $0xd8] sm:$0xff]
    %v703 = vld [vmem:[#allocation7 + $0xe0] sm:$0xff]
    %v704 = vld [vmem:[#allocation7 + $0xe8] sm:$0xff]
    %v705 = vld [vmem:[#allocation7 + $0xf0] sm:$0xff]
    %v706 = vld [vmem:[#allocation7 + $0xf8] sm:$0xff]
    %v707 = vld [vmem:[#allocation7 + $0x100] sm:$0xff]
    %v708 = vld [vmem:[#allocation7 + $0x108] sm:$0xff]
    %v709 = vld [vmem:[#allocation7 + $0x110] sm:$0xff]
    %v710 = vld [vmem:[#allocation7 + $0x118] sm:$0xff]
    %v711 = vld [vmem:[#allocation7 + $0x120] sm:$0xff]
    %v712 = vld [vmem:[#allocation7 + $0x128] sm:$0xff]
    %v713 = vld [vmem:[#allocation7 + $0x130] sm:$0xff]
    %v714 = vld [vmem:[#allocation7 + $0x138] sm:$0xff]
    %v715 = vld [vmem:[#allocation7 + $0x140] sm:$0xff]
    %v716 = vld [vmem:[#allocation7 + $0x148] sm:$0xff]
    %v717 = vld [vmem:[#allocation7 + $0x150] sm:$0xff]
    %v718 = vld [vmem:[#allocation7 + $0x158] sm:$0xff]
    %v719 = vld [vmem:[#allocation7 + $0x160] sm:$0xff]
    %v720 = vld [vmem:[#allocation7 + $0x168] sm:$0xff]
    %v721 = vld [vmem:[#allocation7 + $0x170] sm:$0xff]
    %v722 = vld [vmem:[#allocation7 + $0x178] sm:$0xff]
    %v723 = vld [vmem:[#allocation7 + $0x180] sm:$0xff]
    %v724 = vld [vmem:[#allocation7 + $0x188] sm:$0xff]
    %v725 = vld [vmem:[#allocation7 + $0x190] sm:$0xff]
    %v726 = vld [vmem:[#allocation7 + $0x198] sm:$0xff]
    %v727 = vld [vmem:[#allocation7 + $0x1a0] sm:$0xff]
    %v728 = vld [vmem:[#allocation7 + $0x1a8] sm:$0xff]
    %v729 = vld [vmem:[#allocation7 + $0x1b0] sm:$0xff]
    %v730 = vld [vmem:[#allocation7 + $0x1b8] sm:$0xff]
    %v731 = vld [vmem:[#allocation7 + $0x1c0] sm:$0xff]
    %v732 = vld [vmem:[#allocation7 + $0x1c8] sm:$0xff]
    %v733 = vld [vmem:[#allocation7 + $0x1d0] sm:$0xff]
    %v734 = vld [vmem:[#allocation7 + $0x1d8] sm:$0xff]
    %v735 = vld [vmem:[#allocation7 + $0x1e0] sm:$0xff]
    %v736 = vld [vmem:[#allocation7 + $0x1e8] sm:$0xff]
    %v737 = vld [vmem:[#allocation7 + $0x1f0] sm:$0xff]
    %v738 = vld [vmem:[#allocation7 + $0x1f8] sm:$0xff]
    %v739 = vld [vmem:[%s6] sm:$0x1]
    %v741 = vlaneseq
    %v742 = vshrl.u32 %v741, 7
    %v743 = vsub.s32 0, %v742
    %v744 = vrot.slane %v739, %v743
    %746 = vmatprep.subr.mxu0 0.0
    %747 = vmatpush1.msra.mxu0 %v675
    %748 = vmatprep.subr.mxu0 0.0
    %749 = vmatpush1.msra.mxu0 %v676
    %750 = vmatprep.subr.mxu0 0.0
    %751 = vmatpush1.msra.mxu0 %v677
    %752 = vmatprep.subr.mxu0 0.0
    %753 = vmatpush1.msra.mxu0 %v678
    %754 = vmatprep.subr.mxu0 0.0
    %755 = vmatpush1.msra.mxu0 %v679
    %756 = vmatprep.subr.mxu0 0.0
    %757 = vmatpush1.msra.mxu0 %v680
    %758 = vmatprep.subr.mxu0 0.0
    %759 = vmatpush1.msra.mxu0 %v681
    %760 = vmatprep.subr.mxu0 0.0
    %761 = vmatpush1.msra.mxu0 %v682
    %762 = vmatprep.subr.mxu0 0.0
    %763 = vmatpush1.msra.mxu0 %v683
    %764 = vmatprep.subr.mxu0 0.0
    %765 = vmatpush1.msra.mxu0 %v684
    %766 = vmatprep.subr.mxu0 0.0
    %767 = vmatpush1.msra.mxu0 %v685
    %768 = vmatprep.subr.mxu0 0.0
    %769 = vmatpush1.msra.mxu0 %v686
    %770 = vmatprep.subr.mxu0 0.0
    %771 = vmatpush1.msra.mxu0 %v687
    %772 = vmatprep.subr.mxu0 0.0
    %773 = vmatpush1.msra.mxu0 %v688
    %774 = vmatprep.subr.mxu0 0.0
    %775 = vmatpush1.msra.mxu0 %v689
    %776 = vmatprep.subr.mxu0 0.0
    %777 = vmatpush1.msra.mxu0 %v690
    %778 = vmatprep.subr.mxu0 0.0
    %779 = vmatpush1.msra.mxu0 %v691
    %780 = vmatprep.subr.mxu0 0.0
    %781 = vmatpush1.msra.mxu0 %v692
    %782 = vmatprep.subr.mxu0 0.0
    %783 = vmatpush1.msra.mxu0 %v693
    %784 = vmatprep.subr.mxu0 0.0
    %785 = vmatpush1.msra.mxu0 %v694
    %786 = vmatprep.subr.mxu0 0.0
    %787 = vmatpush1.msra.mxu0 %v695
    %788 = vmatprep.subr.mxu0 0.0
    %789 = vmatpush1.msra.mxu0 %v696
    %790 = vmatprep.subr.mxu0 0.0
    %791 = vmatpush1.msra.mxu0 %v697
    %792 = vmatprep.subr.mxu0 0.0
    %793 = vmatpush1.msra.mxu0 %v698
    %794 = vmatprep.subr.mxu0 0.0
    %795 = vmatpush1.msra.mxu0 %v699
    %796 = vmatprep.subr.mxu0 0.0
    %797 = vmatpush1.msra.mxu0 %v700
    %798 = vmatprep.subr.mxu0 0.0
    %799 = vmatpush1.msra.mxu0 %v701
    %800 = vmatprep.subr.mxu0 0.0
    %801 = vmatpush1.msra.mxu0 %v702
    %802 = vmatprep.subr.mxu0 0.0
    %803 = vmatpush1.msra.mxu0 %v703
    %804 = vmatprep.subr.mxu0 0.0
    %805 = vmatpush1.msra.mxu0 %v704
    %806 = vmatprep.subr.mxu0 0.0
    %807 = vmatpush1.msra.mxu0 %v705
    %808 = vmatprep.subr.mxu0 0.0
    %809 = vmatpush1.msra.mxu0 %v706
    %810 = vmatprep.mubr.f32.mxu0 %v674
    %811 = vmatmul.mubr.f32.gmra.mrb[0].mxu0 %v673
    %v812 = vpop.f32.mrb[0].mxu0
    %v813 = vadd.f32 %v744, %v812
    %v814 = vpop.f32.mrb[0].mxu0
    %815 = vdwg.mxu0
    %816 = vmatprep.subr.mxu0 0.0
    %817 = vmatpush1.msra.mxu0 %v707
    %818 = vmatprep.subr.mxu0 0.0
    %819 = vmatpush1.msra.mxu0 %v708
    %820 = vmatprep.subr.mxu0 0.0
    %821 = vmatpush1.msra.mxu0 %v709
    %822 = vmatprep.subr.mxu0 0.0
    %823 = vmatpush1.msra.mxu0 %v710
    %824 = vmatprep.subr.mxu0 0.0
    %825 = vmatpush1.msra.mxu0 %v711
    %826 = vmatprep.subr.mxu0 0.0
    %827 = vmatpush1.msra.mxu0 %v712
    %828 = vmatprep.subr.mxu0 0.0
    %829 = vmatpush1.msra.mxu0 %v713
    %830 = vmatprep.subr.mxu0 0.0
    %831 = vmatpush1.msra.mxu0 %v714
    %832 = vmatprep.subr.mxu0 0.0
    %833 = vmatpush1.msra.mxu0 %v715
    %834 = vmatprep.subr.mxu0 0.0
    %835 = vmatpush1.msra.mxu0 %v716
    %836 = vmatprep.subr.mxu0 0.0
    %837 = vmatpush1.msra.mxu0 %v717
    %838 = vmatprep.subr.mxu0 0.0
    %839 = vmatpush1.msra.mxu0 %v718
    %840 = vmatprep.subr.mxu0 0.0
    %841 = vmatpush1.msra.mxu0 %v719
    %842 = vmatprep.subr.mxu0 0.0
    %843 = vmatpush1.msra.mxu0 %v720
    %844 = vmatprep.subr.mxu0 0.0
    %845 = vmatpush1.msra.mxu0 %v721
    %846 = vmatprep.subr.mxu0 0.0
    %847 = vmatpush1.msra.mxu0 %v722
    %848 = vmatprep.subr.mxu0 0.0
    %849 = vmatpush1.msra.mxu0 %v723
    %850 = vmatprep.subr.mxu0 0.0
    %851 = vmatpush1.msra.mxu0 %v724
    %852 = vmatprep.subr.mxu0 0.0
    %853 = vmatpush1.msra.mxu0 %v725
    %854 = vmatprep.subr.mxu0 0.0
    %855 = vmatpush1.msra.mxu0 %v726
    %856 = vmatprep.subr.mxu0 0.0
    %857 = vmatpush1.msra.mxu0 %v727
    %858 = vmatprep.subr.mxu0 0.0
    %859 = vmatpush1.msra.mxu0 %v728
    %860 = vmatprep.subr.mxu0 0.0
    %861 = vmatpush1.msra.mxu0 %v729
    %862 = vmatprep.subr.mxu0 0.0
    %863 = vmatpush1.msra.mxu0 %v730
    %864 = vmatprep.subr.mxu0 0.0
    %865 = vmatpush1.msra.mxu0 %v731
    %866 = vmatprep.subr.mxu0 0.0
    %867 = vmatpush1.msra.mxu0 %v732
    %868 = vmatprep.subr.mxu0 0.0
    %869 = vmatpush1.msra.mxu0 %v733
    %870 = vmatprep.subr.mxu0 0.0
    %871 = vmatpush1.msra.mxu0 %v734
    %872 = vmatprep.subr.mxu0 0.0
    %873 = vmatpush1.msra.mxu0 %v735
    %874 = vmatprep.subr.mxu0 0.0
    %875 = vmatpush1.msra.mxu0 %v736
    %876 = vmatprep.subr.mxu0 0.0
    %877 = vmatpush1.msra.mxu0 %v737
    %878 = vmatprep.subr.mxu0 0.0
    %879 = vmatpush1.msra.mxu0 %v738
    %880 = vmatprep.mubr.f32.mxu0 %v382
    %881 = vmatmul.mubr.f32.gmra.mrb[0].mxu0 %v381
    %v882 = vpop.f32.mrb[0].mxu0
    %v883 = vadd.f32 %v813, %v882
    %v884 = vpop.f32.mrb[0].mxu0
    %885 = vdwg.mxu0
    %886 = vst [vmem:[%s7] sm:$0xff] %v883
    // Predicated region
    $region46: #{grade_consistency_head.1} parent=1 // pred_check
      _
    $region47: #{grade_consistency_head.1} parent=1 // pred_check_branch
      %888 = sbr.rel (0) target = $region49
    $region48: #{grade_consistency_head.1} parent=1 // pred_region
      _
    $region49: #{grade_consistency_head.1} parent=1 // pred_fallthru
      _
    // Predicated region
    $region50: #{grade_consistency_head.1} parent=1 // pred_check
      _
    $region51: #{grade_consistency_head.1} parent=1 // pred_check_branch
      %890 = sbr.rel (0) target = $region53
    $region52: #{grade_consistency_head.1} parent=1 // pred_region
      _
    $region53: #{grade_consistency_head.1} parent=1 // pred_fallthru
      _
    %891 = vsyncpa [#allocation3], 1
    %892 = vsyncpa [#allocation5], 1
    %893 = vsyncpa [#allocation8], 1

</llo_original>
